<compile_context>
chip_gen: v7x
topology: tpu7x:2x2x1
jax: 0.10.0
libtpu: 0.0.40
codegen_flags: <defaults>
</compile_context>

<pallas_src>
import jax
import jax.numpy as jnp
from jax.experimental import pallas as pl
from jax.experimental.pallas import tpu as pltpu


def _fbup_conv_kernel(x_ref, w_ref, o_ref):
    """One (image, spatial-tile) step: fused 1x1 conv as a single MXU matmul.

    x_ref: (1, Cin, TM)   NCHW image slab, TM spatial positions on the lane dim
    w_ref: (C4, Cin)      all num_class*scale^2 filters at once
    o_ref: (1, C4, TM)    conv output, still NCHW-flat (lane-dense in TM)
    """
    o_ref[0] = jnp.dot(
        w_ref[...], x_ref[0], preferred_element_type=jnp.float32
    ).astype(o_ref.dtype)


def _pick_tile(hw: int, cin: int, itemsize: int) -> int:
    """Spatial tile size: whole image if small, else a multiple of 128 sized so
    the (double-buffered) x block stays around <= 4 MiB."""
    budget = 4 * 1024 * 1024
    tm = (budget // max(1, cin * itemsize)) // 128 * 128
    tm = max(128, min(2048, tm))
    return hw if hw <= tm else tm


def fbupsampling_forward(x_nchw, conv_w, *, scale=2):
    """FBupsampling.forward(x) with NCHW I/O, matching the PyTorch module."""
    N, Cin, H, W = x_nchw.shape
    C4 = conv_w.shape[0]                       # num_class * scale**2
    assert C4 % (scale * scale) == 0
    Cout = C4 // (scale * scale)
    HW = H * W

    out_dtype = jnp.result_type(x_nchw.dtype, conv_w.dtype)
    w2 = conv_w[:, :, 0, 0]                    # (C4, Cin): 1x1 conv == matmul
    x_flat = x_nchw.reshape(N, Cin, HW)        # free view of NCHW (no copy)

    tm = _pick_tile(HW, Cin, jnp.dtype(x_nchw.dtype).itemsize)
    grid = (N, pl.cdiv(HW, tm))

    y = pl.pallas_call(
        _fbup_conv_kernel,
        out_shape=jax.ShapeDtypeStruct((N, C4, HW), out_dtype),
        grid_spec=pltpu.PrefetchScalarGridSpec(
            num_scalar_prefetch=0,
            grid=grid,
            in_specs=[
                pl.BlockSpec((1, Cin, tm), lambda n, t: (n, 0, t)),
                pl.BlockSpec((C4, Cin), lambda n, t: (0, 0)),
            ],
            out_specs=pl.BlockSpec((1, C4, tm), lambda n, t: (n, 0, t)),
        ),
        compiler_params=pltpu.CompilerParams(
            dimension_semantics=("parallel", "parallel")),
    )(x_flat, w2)

    # Depth-to-space (pure layout): channel k = (s1*scale + s2)*Cout + oc lands
    # at out[n, oc, scale*h + s1, scale*w + s2].  One fused 6-D transpose; the
    # reshapes are free contiguous dim merges/splits.
    y = y.reshape(N, scale, scale, Cout, H, W)          # (n, s1, s2, oc, h, w)
    y = jnp.transpose(y, (0, 3, 4, 1, 5, 2))            # (n, oc, h, s1, w, s2)
    return y.reshape(N, Cout, scale * H, scale * W)


def ref_forward(x, conv_w, *, scale=2):
    """Pure-JAX reference mirroring the PyTorch permute/view chain exactly."""
    N, Cin, H, W = x.shape
    C = conv_w.shape[0]
    y = jnp.einsum('nihw,ki->nkhw', x, conv_w[:, :, 0, 0])      # conv_w (1x1)
    xp = jnp.transpose(y, (0, 3, 2, 1))                          # N, W, H, C
    xp = xp.reshape(N, W, H * scale, C // scale)
    xp = jnp.transpose(xp, (0, 2, 1, 3))                         # N, sH, W, C/s
    xp = xp.reshape(N, H * scale, W * scale, C // (scale * scale))
    return jnp.transpose(xp, (0, 3, 1, 2))                       # N, C/s^2, sH, sW


if __name__ == "__main__":
    key = jax.random.PRNGKey(0)
    k1, k2 = jax.random.split(key, 2)

    N, inplanes, H, W = 2, 4, 16, 16
    scale, num_class = 2, 8                    # small test sizes

    x = jax.random.normal(k1, (N, inplanes, H, W), jnp.float32)
    # conv_w weight of FBupsampling: (num_class*scale*scale, inplanes, 1, 1)
    conv_w = 0.1 * jax.random.normal(
        k2, (num_class * scale * scale, inplanes, 1, 1), jnp.float32)

    out = fbupsampling_forward(x, conv_w, scale=scale)
    out = jax.block_until_ready(out)

    assert out.shape == (N, num_class, scale * H, scale * W), out.shape
    ref = ref_forward(x, conv_w, scale=scale)
    assert bool(jnp.allclose(out, ref, rtol=1e-4, atol=1e-4)), (
        "mismatch vs reference")
    print("KERNEL_OK")
</pallas_src>

<mosaic_0001>
module attributes {stable_mosaic.version = 11 : i64} {
  func.func @_fbup_conv_kernel(%arg0: i32, %arg1: i32, %arg2: memref<1x4x256xf32, #tpu.memory_space<vmem>>, %arg3: memref<32x4xf32, #tpu.memory_space<vmem>>, %arg4: memref<1x32x256xf32, #tpu.memory_space<vmem>>) attributes {dimension_semantics = [#tpu.dimension_semantics<parallel>, #tpu.dimension_semantics<parallel>], iteration_bounds = array<i64: 2, 1>, scalar_prefetch = 0 : i64, scratch_operands = 0 : i64, tpu.core_type = #tpu.core_type<tc>, window_params = [{transform_indices = @transform_0, window_bounds = array<i64: 1, 4, 256>}, {pipeline_mode = #tpu.pipeline_mode<synchronous>, transform_indices = @transform_1, window_bounds = array<i64: 32, 4>}, {transform_indices = @transform_2, window_bounds = array<i64: 1, 32, 256>}]} {
    %c0 = arith.constant 0 : index
    %c0_0 = arith.constant 0 : index
    %0 = vector.load %arg3[%c0, %c0_0] : memref<32x4xf32, #tpu.memory_space<vmem>>, vector<32x4xf32>
    %c0_1 = arith.constant 0 : index
    %c0_2 = arith.constant 0 : index
    %c0_3 = arith.constant 0 : index
    %1 = vector.load %arg2[%c0_1, %c0_2, %c0_3] : memref<1x4x256xf32, #tpu.memory_space<vmem>>, vector<1x4x256xf32>
    %2 = vector.shape_cast %1 : vector<1x4x256xf32> to vector<4x256xf32>
    %cst = arith.constant dense<0.000000e+00> : vector<32x256xf32>
    %3 = tpu.matmul %0, %2, %cst {dimension_numbers = #tpu.dot_dimension_numbers<[1], [0], [0], [1], [0, 0, 1, 1], [], []>} : vector<32x4xf32>, vector<4x256xf32>, vector<32x256xf32> -> vector<32x256xf32>
    %c0_4 = arith.constant 0 : index
    %c0_5 = arith.constant 0 : index
    %c0_6 = arith.constant 0 : index
    %4 = vector.load %arg4[%c0_4, %c0_5, %c0_6] : memref<1x32x256xf32, #tpu.memory_space<vmem>>, vector<1x32x256xf32>
    %5 = vector.shape_cast %4 : vector<1x32x256xf32> to vector<32x256xf32>
    %6 = vector.shape_cast %3 : vector<32x256xf32> to vector<1x32x256xf32>
    tpu.vector_store %arg4[%c0_4, %c0_5, %c0_6], %6 {strides = array<i32>} : memref<1x32x256xf32, #tpu.memory_space<vmem>>, vector<1x32x256xf32>,
    return
  }
  func.func @transform_0(%arg0: i32, %arg1: i32) -> (i32, i32, i32) {
    %c0_i32 = arith.constant 0 : i32
    %c0_i32_0 = arith.constant 0 : i32
    return %arg0, %c0_i32, %arg1 : i32, i32, i32
  }
  func.func @transform_1(%arg0: i32, %arg1: i32) -> (i32, i32) {
    %c0_i32 = arith.constant 0 : i32
    %c0_i32_0 = arith.constant 0 : i32
    %c0_i32_1 = arith.constant 0 : i32
    return %c0_i32, %c0_i32_0 : i32, i32
  }
  func.func @transform_2(%arg0: i32, %arg1: i32) -> (i32, i32, i32) {
    %c0_i32 = arith.constant 0 : i32
    %c0_i32_0 = arith.constant 0 : i32
    return %arg0, %c0_i32, %arg1 : i32, i32, i32
  }
}

</mosaic_0001>

<llo_original>
// kernel: tpu_custom_call.1
$region0: #{tpu_custom_call.1}
  #allocation0 [shape = 'u32[]', space=smem, size = 0x4, offset = 0x4, fixed_abs, tag = 'smem constant byte address 0x4 - core index']
  #allocation1 [shape = 'u32[144,128]{1,0:T(1,128)}', space=vmem, size = 0x12000, scoped, tag = 'internal scratch']
  %s0 = inlined_call_operand.vmem [shape: f32[2,4,256], index: 0, kind: input, shape index: {}]
  %s1 = inlined_call_operand.vmem [shape: f32[32,4], index: 1, kind: input, shape index: {}]
  %s2 = inlined_call_operand.hbm [shape: f32[2,32,256], index: 2, kind: output, shape index: {}]
  %s3 = sld [smem:[#allocation0]]
  $region41: #{tpu_custom_call.1} parent=0
    _
  %s5 = ssub.s32 1, %s3
  %s6 = scalar_select 0, %s5, %s3
  $region1: #{tpu_custom_call.1} parent=0
    #allocation2 [shape = 'u8[65536]{0}', space=vmem, size = 0x10000, scoped, tag = 'output window, operand 0']
    #allocation3 [shape = 's32[2]{0}', space=sflag, size = 0x8, scoped, tag = 'scoped memory for tpu_custom_call.1']
    %7 = vsyncpa [#allocation3], 0
    %s8 = scalar_lea.sflag [#allocation3], 1
    %9 = vsyncpa %s8, 0
    loop: start=0, step=1, limit=4
    $region2: #{tpu_custom_call.1} parent=1 // loop_pre_header
      _
    $region3: #{tpu_custom_call.1} parent=1 // loop_header
      %s11 = sphi 0, %s15
      %p12 = scmp.ge.s32.totalorder %s11, 4
      %s18 = sphi 0, %s30
      %s19 = sphi 0, %s26
      %s20 = sphi 0, %s18
      %s21 = sphi 0, %s19
      %s22 = sphi 0, %s20
      %s23 = sphi 0, %s21
      %s35 = sphi 0, %s37
      %s38 = sphi 0, %s35
      %s39 = sphi 0, %s38
      %s55 = sphi 0, %s39
      %s59 = sphi 0, %s59
      %s61 = sphi 0, %s59
      %s62 = sphi 0, %s61
      %s76 = sphi 0, %s62
      %s84 = sphi 0, %s86
      %s87 = sphi 0, %s84
      %s88 = sphi 0, %s87
      %s104 = sphi 0, %s88
    $region4: #{tpu_custom_call.1} parent=1 // loop_header_branch
      %14 = sbr.rel (%p12) target = $region8
    $region5: #{tpu_custom_call.1} parent=1 // loop_body
      %s16 = ssub.s32 %s11, 1
      %s17 = ssub.s32 %s11, 2
      %s24 = sadd.s32 1, %s19
      %p25 = scmp.ge.s32.totalorder %s24, 1
      %s26 = scalar_select %p25, 0, %s24
      %s27 = sadd.s32 1, %s18
      %s28 = scalar_select %p25, %s27, %s18
      %p29 = scmp.ge.s32.totalorder %s28, 2
      %s30 = scalar_select %p29, 0, %s28
      %s31 = ssub.s32 %s18, %s30
      %s32 = ssub.s32 %s19, %s26
      %s33 = sor.u32 %s31, %s32
      %p34 = scmp.eq.s32.totalorder %s33, 0
      %s36 = sadd.s32 %s35, 1
      %s37 = scalar_select %p34, %s35, %s36
      %p40 = pneg %p34
      %p41 = scmp.eq.s32.totalorder %s11, 1
      %p42 = por %p40, %p41
      %p43 = scmp.ne.s32.totalorder %s35, %s38
      %p44 = scmp.eq.s32.totalorder %s11, 0
      %p45 = por %p43, %p44
      %p46 = scmp.ne.s32.totalorder %s35, %s38
      %p47 = scmp.eq.s32.totalorder %s16, 1
      %p48 = por %p46, %p47
      %p49 = scmp.ne.s32.totalorder %s38, %s39
      %p50 = scmp.eq.s32.totalorder %s16, 0
      %p51 = por %p49, %p50
      %p52 = scmp.ne.s32.totalorder %s38, %s39
      %p53 = scmp.eq.s32.totalorder %s17, 1
      %p54 = por %p52, %p53
      %p56 = scmp.ne.s32.totalorder %s39, %s55
      %p57 = scmp.eq.s32.totalorder %s17, 0
      %p58 = por %p56, %p57
      %s60 = sadd.s32 %s59, 1
      %p63 = scmp.eq.s32.totalorder %s11, 1
      %p64 = scmp.ne.s32.totalorder %s59, %s61
      %p65 = scmp.eq.s32.totalorder %s11, 0
      %p66 = por %p64, %p65
      %p67 = scmp.ne.s32.totalorder %s59, %s61
      %p68 = scmp.eq.s32.totalorder %s16, 1
      %p69 = por %p67, %p68
      %p70 = scmp.ne.s32.totalorder %s61, %s62
      %p71 = scmp.eq.s32.totalorder %s16, 0
      %p72 = por %p70, %p71
      %p73 = scmp.ne.s32.totalorder %s61, %s62
      %p74 = scmp.eq.s32.totalorder %s17, 1
      %p75 = por %p73, %p74
      %p77 = scmp.ne.s32.totalorder %s62, %s76
      %p78 = scmp.eq.s32.totalorder %s17, 0
      %p79 = por %p77, %p78
      %s80 = ssub.s32 %s18, %s30
      %s81 = ssub.s32 %s19, %s26
      %s82 = sor.u32 %s80, %s81
      %p83 = scmp.eq.s32.totalorder %s82, 0
      %s85 = sadd.s32 %s84, 1
      %s86 = scalar_select %p83, %s84, %s85
      %p89 = pneg %p83
      %p90 = scmp.eq.s32.totalorder %s11, 1
      %p91 = por %p89, %p90
      %p92 = scmp.ne.s32.totalorder %s84, %s87
      %p93 = scmp.eq.s32.totalorder %s11, 0
      %p94 = por %p92, %p93
      %p95 = scmp.ne.s32.totalorder %s84, %s87
      %p96 = scmp.eq.s32.totalorder %s16, 1
      %p97 = por %p95, %p96
      %p98 = scmp.ne.s32.totalorder %s87, %s88
      %p99 = scmp.eq.s32.totalorder %s16, 0
      %p100 = por %p98, %p99
      %p101 = scmp.ne.s32.totalorder %s87, %s88
      %p102 = scmp.eq.s32.totalorder %s17, 1
      %p103 = por %p101, %p102
      %p105 = scmp.ne.s32.totalorder %s88, %s104
      %p106 = scmp.eq.s32.totalorder %s17, 0
      %p107 = por %p105, %p106
      %p108 = scmp.le.s32.totalorder 1, %s11
      %p109 = scmp.lt.s32.totalorder %s11, 3
      %p110 = pnand %p108, %p109
      %p111 = pneg %p110
      // Predicated region
      $region9: #{tpu_custom_call.1} parent=5 // pred_check
        _
      $region10: #{tpu_custom_call.1} parent=5 // pred_check_branch
        %113 = sbr.rel (%p110) target = $region12
      $region11: #{tpu_custom_call.1} parent=5 // pred_region
        %s114 = ssub.s32 %s11, 1
        // Predicated region
        $region13: #{tpu_custom_call.1} parent=11 // pred_check
          %p115 = pneg %p72
        $region14: #{tpu_custom_call.1} parent=11 // pred_check_branch
          %117 = sbr.rel (%p115) target = $region16
        $region15: #{tpu_custom_call.1} parent=11 // pred_region
          _
        $region16: #{tpu_custom_call.1} parent=11 // pred_fallthru
          _
      $region12: #{tpu_custom_call.1} parent=5 // pred_fallthru
        _
      %p118 = scmp.lt.s32.totalorder %s11, 2
      // Predicated region
      $region17: #{tpu_custom_call.1} parent=5 // pred_check
        %p119 = pneg %p118
      $region18: #{tpu_custom_call.1} parent=5 // pred_check_branch
        %121 = sbr.rel (%p119) target = $region20
      $region19: #{tpu_custom_call.1} parent=5 // pred_region
        // Predicated region
        $region21: #{tpu_custom_call.1} parent=19 // pred_check
          %p122 = pneg %p45
        $region22: #{tpu_custom_call.1} parent=19 // pred_check_branch
          %124 = sbr.rel (%p122) target = $region24
        $region23: #{tpu_custom_call.1} parent=19 // pred_region
          %s125 = smul.u32 2, %s19
          %p126 = scmp.lt.s32.totalorder %s18, 1
          %s127 = scalar_select %p126, %s18, 1
          %p128 = scmp.lt.s32.totalorder %s125, 1
          %s129 = scalar_select %p128, %s125, 1
          %s130 = smul.addr %s127, 2
          %s131 = sadd.s32 %s129, %s130
          %s132 = smul.addr %s131, 4
          %s133 = scalar_lea.vmem %s0, %s132
          %s134 = smul.u32 2, %s19
        $region24: #{tpu_custom_call.1} parent=19 // pred_fallthru
          _
      $region20: #{tpu_custom_call.1} parent=5 // pred_fallthru
        _
      %p135 = scmp.le.s32.totalorder 1, %s11
      %p136 = scmp.lt.s32.totalorder %s11, 3
      %p137 = pnand %p135, %p136
      %p138 = pneg %p137
      // Predicated region
      $region25: #{tpu_custom_call.1} parent=5 // pred_check
        _
      $region26: #{tpu_custom_call.1} parent=5 // pred_check_branch
        %140 = sbr.rel (%p137) target = $region28
      $region27: #{tpu_custom_call.1} parent=5 // pred_region
        %s141 = ssub.s32 %s11, 1
        %s142 = smul.u32 2, %s21
        %p143 = scmp.lt.s32.totalorder %s20, 1
        %s144 = scalar_select %p143, %s20, 1
        %p145 = scmp.lt.s32.totalorder %s142, 1
        %s146 = scalar_select %p145, %s142, 1
        %s147 = smul.addr %s144, 2
        %s148 = sadd.s32 %s146, %s147
        %s149 = smul.addr %s148, 4
        %s150 = scalar_lea.vmem %s0, %s149
        %p151 = pneg %p51
        %p152 = pneg %p48
        %p153 = pneg %p72
        %p154 = pneg %p69
        %p155 = pneg %p100
        %p156 = pneg %p97
        %s157 = sand.u32 %s87, 1
        %s158 = scalar_lea.sflag [#allocation3], %s157
        %s159 = sand.u32 %s87, 1
        %s160 = smul.addr %s159, 64
        %s161 = scalar_lea.vmem [#allocation2], %s160
        %s162 = smul.u32 2, %s21
        %p163 = scmp.lt.s32.totalorder %s20, 1
        %s164 = scalar_select %p163, %s20, 1
        %p165 = scmp.lt.s32.totalorder %s162, 1
        %s166 = scalar_select %p165, %s162, 1
        %s167 = smul.addr %s164, 2
        %s168 = sadd.s32 %s166, %s167
        %s169 = smul.addr %s168, 4
        %s170 = scalar_lea.vmem %s0, %s169
        %s171 = smul.u32 2, %s21
        %s172 = smul.u32 2, %s21
        %v173 = vld [vmem:[%s1] sm:$0xff]
        %v174 = vld [vmem:[%s1 + $0x8] sm:$0xff]
        %v175 = vld [vmem:[%s1 + $0x10] sm:$0xff]
        %v176 = vld [vmem:[%s1 + $0x18] sm:$0xff]
        %v177 = vld [vmem:[%s170] sm:$0xff]
        %v179 = vcombine.high %v177, %v177
        %vm180 = vcmask 31744
        %v182 = vsel %vm180, %v173, 0
        %v185 = vsel %vm180, %v174, 0
        %v188 = vsel %vm180, %v175, 0
        %v191 = vsel %vm180, %v176, 0
        %vm193 = vcmask 1043456
        %v194 = vsel %vm193, %v177, 0
        %v196 = vsel %vm193, %v179, 0
        %198 = vmatprep.subr.mxu0 %v196
        %199 = vmatpush1.msra.mxu0 %v194
        %200 = vmatprep.subr.mxu0 0.0
        %201 = vmatpush1.msra.mxu0 0.0
        %202 = vmatprep.subr.mxu0 0.0
        %203 = vmatpush1.msra.mxu0 0.0
        %204 = vmatprep.subr.mxu0 0.0
        %205 = vmatpush1.msra.mxu0 0.0
        %206 = vmatprep.subr.mxu0 0.0
        %207 = vmatpush1.msra.mxu0 0.0
        %208 = vmatprep.subr.mxu0 0.0
        %209 = vmatpush1.msra.mxu0 0.0
        %210 = vmatprep.subr.mxu0 0.0
        %211 = vmatpush1.msra.mxu0 0.0
        %212 = vmatprep.subr.mxu0 0.0
        %213 = vmatpush1.msra.mxu0 0.0
        %214 = vmatprep.subr.mxu0 0.0
        %215 = vmatpush1.msra.mxu0 0.0
        %216 = vmatprep.subr.mxu0 0.0
        %217 = vmatpush1.msra.mxu0 0.0
        %218 = vmatprep.subr.mxu0 0.0
        %219 = vmatpush1.msra.mxu0 0.0
        %220 = vmatprep.subr.mxu0 0.0
        %221 = vmatpush1.msra.mxu0 0.0
        %222 = vmatprep.subr.mxu0 0.0
        %223 = vmatpush1.msra.mxu0 0.0
        %224 = vmatprep.subr.mxu0 0.0
        %225 = vmatpush1.msra.mxu0 0.0
        %226 = vmatprep.subr.mxu0 0.0
        %227 = vmatpush1.msra.mxu0 0.0
        %228 = vmatprep.subr.mxu0 0.0
        %229 = vmatpush1.msra.mxu0 0.0
        %230 = vmatprep.subr.mxu0 0.0
        %231 = vmatpush1.msra.mxu0 0.0
        %232 = vmatprep.subr.mxu0 0.0
        %233 = vmatpush1.msra.mxu0 0.0
        %234 = vmatprep.subr.mxu0 0.0
        %235 = vmatpush1.msra.mxu0 0.0
        %236 = vmatprep.subr.mxu0 0.0
        %237 = vmatpush1.msra.mxu0 0.0
        %238 = vmatprep.subr.mxu0 0.0
        %239 = vmatpush1.msra.mxu0 0.0
        %240 = vmatprep.subr.mxu0 0.0
        %241 = vmatpush1.msra.mxu0 0.0
        %242 = vmatprep.subr.mxu0 0.0
        %243 = vmatpush1.msra.mxu0 0.0
        %244 = vmatprep.subr.mxu0 0.0
        %245 = vmatpush1.msra.mxu0 0.0
        %246 = vmatprep.subr.mxu0 0.0
        %247 = vmatpush1.msra.mxu0 0.0
        %248 = vmatprep.subr.mxu0 0.0
        %249 = vmatpush1.msra.mxu0 0.0
        %250 = vmatprep.subr.mxu0 0.0
        %251 = vmatpush1.msra.mxu0 0.0
        %252 = vmatprep.subr.mxu0 0.0
        %253 = vmatpush1.msra.mxu0 0.0
        %254 = vmatprep.subr.mxu0 0.0
        %255 = vmatpush1.msra.mxu0 0.0
        %256 = vmatprep.subr.mxu0 0.0
        %257 = vmatpush1.msra.mxu0 0.0
        %258 = vmatprep.subr.mxu0 0.0
        %259 = vmatpush1.msra.mxu0 0.0
        %260 = vmatprep.subr.mxu0 0.0
        %261 = vmatpush1.msra.mxu0 0.0
        %262 = vmatprep.mubr.f32.mxu0 0.0
        %263 = vmatmul.mubr.f32.gmra.mrb[0].mxu0 %v182
        %v264 = vpop.f32.mrb[0].mxu0
        %v265 = vadd.f32 0.0, %v264
        %v266 = vpop.f32.mrb[0].mxu0
        %v267 = vadd.f32 0.0, %v266
        %268 = vmatprep.mubr.f32.mxu0 0.0
        %269 = vmatmul.mubr.f32.gmra.mrb[0].mxu0 %v185
        %v270 = vpop.f32.mrb[0].mxu0
        %v271 = vadd.f32 0.0, %v270
        %v272 = vpop.f32.mrb[0].mxu0
        %v273 = vadd.f32 0.0, %v272
        %274 = vmatprep.mubr.f32.mxu0 0.0
        %275 = vmatmul.mubr.f32.gmra.mrb[0].mxu0 %v188
        %v276 = vpop.f32.mrb[0].mxu0
        %v277 = vadd.f32 0.0, %v276
        %v278 = vpop.f32.mrb[0].mxu0
        %v279 = vadd.f32 0.0, %v278
        %280 = vmatprep.mubr.f32.mxu0 0.0
        %281 = vmatmul.mubr.f32.gmra.mrb[0].mxu0 %v191
        %v282 = vpop.f32.mrb[0].mxu0
        %v283 = vadd.f32 0.0, %v282
        %v284 = vpop.f32.mrb[0].mxu0
        %v285 = vadd.f32 0.0, %v284
        %286 = vdwg.mxu0
        %287 = vst [vmem:[%s161] sm:$0xff] %v265
        %288 = vst [vmem:[%s161 + $0x8] sm:$0xff] %v267
        %289 = vst [vmem:[%s161 + $0x10] sm:$0xff] %v271
        %290 = vst [vmem:[%s161 + $0x18] sm:$0xff] %v273
        %291 = vst [vmem:[%s161 + $0x20] sm:$0xff] %v277
        %292 = vst [vmem:[%s161 + $0x28] sm:$0xff] %v279
        %293 = vst [vmem:[%s161 + $0x30] sm:$0xff] %v283
        %294 = vst [vmem:[%s161 + $0x38] sm:$0xff] %v285
        %s295 = sand.u32 %s87, 1
        %s296 = scalar_lea.sflag [#allocation3], %s295
        %s297 = sand.u32 %s87, 1
        %s298 = smul.addr %s297, 64
        %s299 = scalar_lea.vmem [#allocation2], %s298
        // Predicated region
        $region29: #{tpu_custom_call.1} parent=27 // pred_check
          %p300 = pneg %p97
        $region30: #{tpu_custom_call.1} parent=27 // pred_check_branch
          %302 = sbr.rel (%p300) target = $region32
        $region31: #{tpu_custom_call.1} parent=27 // pred_region
          %s303 = smul.u32 2, %s21
          %s305 = ssub.s32 1024, 1024
          %306 = vsyncadd %s296, %s305
          %s307 = smul.addr %s20, 8
          %s308 = sadd.s32 %s303, %s307
          %s309 = smul.addr %s308, 128
          %s310 = scalar_lea.hbm %s2, %s309
          %s311 = sshll.u32 %s299, 4
          %s312 = int_to_ptr.vmem [resolvable:$true] %s311
          %317 = dma.vmem_to_hbm [thread:$0]  %s312, 1024, %s310, %s296, 256, 256, 16
        $region32: #{tpu_custom_call.1} parent=27 // pred_fallthru
          _
      $region28: #{tpu_custom_call.1} parent=5 // pred_fallthru
        _
      %p318 = scmp.le.s32.totalorder 2, %s11
      // Predicated region
      $region33: #{tpu_custom_call.1} parent=5 // pred_check
        %p319 = pneg %p318
      $region34: #{tpu_custom_call.1} parent=5 // pred_check_branch
        %321 = sbr.rel (%p319) target = $region36
      $region35: #{tpu_custom_call.1} parent=5 // pred_region
        %s322 = ssub.s32 %s11, 2
        // Predicated region
        $region37: #{tpu_custom_call.1} parent=35 // pred_check
          %p323 = pneg %p103
        $region38: #{tpu_custom_call.1} parent=35 // pred_check_branch
          %325 = sbr.rel (%p323) target = $region40
        $region39: #{tpu_custom_call.1} parent=35 // pred_region
          %s326 = sand.u32 %s88, 1
          %s327 = scalar_lea.sflag [#allocation3], %s326
          %s328 = sand.u32 %s88, 1
          %s329 = smul.addr %s328, 64
          %s330 = scalar_lea.vmem [#allocation2], %s329
          %331 = dma.done %s327, 1024
        $region40: #{tpu_custom_call.1} parent=35 // pred_fallthru
          _
      $region36: #{tpu_custom_call.1} parent=5 // pred_fallthru
        _
    $region6: #{tpu_custom_call.1} parent=1 // loop_footer
      %s15 = sadd.s32 1, %s11
    $region7: #{tpu_custom_call.1} parent=1 // loop_footer_branch
      %10 = sbr.rel target = $region3
    $region8: #{tpu_custom_call.1} parent=1 // loop_exit
      _
    %332 = vsyncpa [#allocation3], 1
    %s333 = scalar_lea.sflag [#allocation3], 1
    %334 = vsyncpa %s333, 1

</llo_original>
